<compile_context>
chip_gen: v6e
topology: v6e:2x2x1
jax: 0.10.0
libtpu: 0.0.40
codegen_flags: <defaults>
</compile_context>

<pallas_src>
import functools

import jax
import jax.numpy as jnp
from jax import lax
from jax.experimental import pallas as pl
from jax.experimental.pallas import tpu as pltpu


def _rms_norm_kernel(x_ref, w_ref, o_ref, *, eps: float):
    # x_ref: (TR, D) tile, w_ref: (1, D) fp32 weight, o_ref: (TR, D) promoted dtype.
    # Compute in fp32 (matches torch: hidden_states.to(torch.float32)).
    x32 = x_ref[...].astype(jnp.float32)
    var = jnp.mean(x32 * x32, axis=-1, keepdims=True)        # (TR, 1) lane reduction
    inv = lax.rsqrt(var + eps)                                # EUP rsqrt
    # Re-read + re-cast x for the normalization multiply so the fp32 tile copy
    # does not have to stay live across the reduction (VMEM / spill relief).
    normed = (x_ref[...].astype(jnp.float32) * inv).astype(x_ref.dtype)
    # fp32 weight * input-dtype normed -> torch-style promotion to out dtype.
    o_ref[...] = (w_ref[...] * normed).astype(o_ref.dtype)


def rms_norm(x: jax.Array, weight: jax.Array, *, eps: float = 1e-6,
             tile_rows: int | None = None,
             vmem_budget_bytes: int = 24 * 1024 * 1024) -> jax.Array:
    """RMSNorm over the last axis, matching the PyTorch module's forward."""
    orig_shape = x.shape
    dim = orig_shape[-1]
    assert weight.shape == (dim,)

    # Output dtype follows PyTorch type promotion of `weight * x.to(input_dtype)`.
    out_dtype = jnp.result_type(x.dtype, weight.dtype)

    rows = 1
    for s in orig_shape[:-1]:
        rows *= s
    x2 = x.reshape(rows, dim)
    w2 = weight.reshape(1, dim)

    in_bytes = jnp.dtype(x.dtype).itemsize
    out_bytes = jnp.dtype(out_dtype).itemsize
    # Per-row VMEM footprint per grid step:
    #   2x double-buffered input + output streams, plus ~2 fp32 tiles of
    #   in-body temporaries (x*x / normalized product).
    per_row_bytes = 2 * (in_bytes + out_bytes) * dim + 2 * 4 * dim

    rows_up = ((rows + 7) // 8) * 8
    if tile_rows is None:
        tr = max(8, vmem_budget_bytes // max(1, per_row_bytes))
        tr = max(8, (tr // 8) * 8)              # sublane-aligned
        tile_rows = int(min(tr, rows_up, 8192))  # don't exceed data / go absurdly tall
    else:
        tile_rows = max(8, (int(tile_rows) // 8) * 8)
        tile_rows = int(min(tile_rows, rows_up))

    grid = (pl.cdiv(rows, tile_rows),)
    kernel = functools.partial(_rms_norm_kernel, eps=eps)

    out = pl.pallas_call(
        kernel,
        out_shape=jax.ShapeDtypeStruct((rows, dim), out_dtype),
        grid_spec=pltpu.PrefetchScalarGridSpec(
            num_scalar_prefetch=0,
            grid=grid,
            in_specs=[
                pl.BlockSpec((tile_rows, dim), lambda i: (i, 0)),
                pl.BlockSpec((1, dim), lambda i: (0, 0)),   # weight: resident, no re-fetch
            ],
            out_specs=pl.BlockSpec((tile_rows, dim), lambda i: (i, 0)),
        ),
        compiler_params=pltpu.CompilerParams(
            dimension_semantics=("parallel",),
            # Above v5e's 16 MiB scoped default, well below v7x's 64 MiB physical.
            vmem_limit_bytes=48 * 1024 * 1024,
        ),
    )(x2, w2)

    return out.reshape(orig_shape[:-1] + (dim,))


def _rms_norm_ref(x, weight, eps=1e-6):
    """Pure-JAX reference mirroring the PyTorch forward exactly."""
    input_dtype = x.dtype
    h = x.astype(jnp.float32)
    var = jnp.mean(h * h, axis=-1, keepdims=True)
    h = h * lax.rsqrt(var + eps)
    return weight * h.astype(input_dtype)   # promotion like torch


if __name__ == "__main__":
    key = jax.random.PRNGKey(0)

    # Module config: hidden_size D, weight initialized to ones (nn.Parameter(torch.ones)).
    B, N, D = 2, 8, 32
    eps = 1e-6
    weight = jnp.ones((D,), dtype=jnp.float32)

    # --- fp32 path ---
    k1, k2 = jax.random.split(key)
    x = jax.random.normal(k1, (B, N, D), dtype=jnp.float32)
    out = rms_norm(x, weight, eps=eps)
    jax.block_until_ready(out)
    ref = _rms_norm_ref(x, weight, eps)
    assert out.shape == x.shape
    assert out.dtype == ref.dtype
    assert jnp.allclose(out, ref, atol=1e-5, rtol=1e-5)

    # --- bf16 input path (fp32 compute inside kernel, cast-back, fp32 weight) ---
    # Uses a row count not divisible by 8 to exercise the ragged last block.
    x_bf16 = jax.random.normal(k2, (3, 7, D), dtype=jnp.float32).astype(jnp.bfloat16)
    out_bf16 = rms_norm(x_bf16, weight, eps=eps)
    jax.block_until_ready(out_bf16)
    ref_bf16 = _rms_norm_ref(x_bf16, weight, eps)
    assert out_bf16.shape == x_bf16.shape
    assert out_bf16.dtype == ref_bf16.dtype            # fp32 (torch promotion w/ fp32 weight)
    assert jnp.allclose(out_bf16.astype(jnp.float32),
                        ref_bf16.astype(jnp.float32), atol=2e-2, rtol=2e-2)

    print("KERNEL_OK")
</pallas_src>

<mosaic_0001>
module attributes {stable_mosaic.version = 11 : i64} {
  func.func @_rms_norm_kernel(%arg0: i32, %arg1: memref<16x32xf32, #tpu.memory_space<vmem>>, %arg2: memref<1x32xf32, #tpu.memory_space<vmem>>, %arg3: memref<16x32xf32, #tpu.memory_space<vmem>>) attributes {dimension_semantics = [#tpu.dimension_semantics<parallel>], iteration_bounds = array<i64: 1>, scalar_prefetch = 0 : i64, scratch_operands = 0 : i64, tpu.core_type = #tpu.core_type<tc>, window_params = [{transform_indices = @transform_0, window_bounds = array<i64: 16, 32>}, {pipeline_mode = #tpu.pipeline_mode<synchronous>, transform_indices = @transform_1, window_bounds = array<i64: 1, 32>}, {transform_indices = @transform_2, window_bounds = array<i64: 16, 32>}]} {
    %c0 = arith.constant 0 : index
    %c0_0 = arith.constant 0 : index
    %0 = vector.load %arg1[%c0, %c0_0] : memref<16x32xf32, #tpu.memory_space<vmem>>, vector<16x32xf32>
    %1 = arith.mulf %0, %0 : vector<16x32xf32>
    %cst = arith.constant dense<0.000000e+00> : vector<16xf32>
    %2 = vector.multi_reduction <add>, %1, %cst [1] : vector<16x32xf32> to vector<16xf32>
    %3 = vector.shape_cast %2 : vector<16xf32> to vector<16x1xf32>
    %cst_1 = arith.constant 3.200000e+01 : f32
    %4 = vector.broadcast %cst_1 : f32 to vector<16x1xf32>
    %5 = arith.divf %3, %4 : vector<16x1xf32>
    %cst_2 = arith.constant 9.99999997E-7 : f32
    %6 = vector.broadcast %cst_2 : f32 to vector<16x1xf32>
    %7 = arith.addf %5, %6 : vector<16x1xf32>
    %8 = math.rsqrt %7 : vector<16x1xf32>
    %c0_3 = arith.constant 0 : index
    %c0_4 = arith.constant 0 : index
    %9 = vector.load %arg1[%c0_3, %c0_4] : memref<16x32xf32, #tpu.memory_space<vmem>>, vector<16x32xf32>
    %10 = vector.broadcast %8 : vector<16x1xf32> to vector<16x32xf32>
    %11 = arith.mulf %9, %10 : vector<16x32xf32>
    %c0_5 = arith.constant 0 : index
    %c0_6 = arith.constant 0 : index
    %12 = vector.load %arg2[%c0_5, %c0_6] : memref<1x32xf32, #tpu.memory_space<vmem>>, vector<1x32xf32>
    %13 = vector.broadcast %12 : vector<1x32xf32> to vector<16x32xf32>
    %14 = arith.mulf %13, %11 : vector<16x32xf32>
    %c0_7 = arith.constant 0 : index
    %c0_8 = arith.constant 0 : index
    %15 = vector.load %arg3[%c0_7, %c0_8] : memref<16x32xf32, #tpu.memory_space<vmem>>, vector<16x32xf32>
    tpu.vector_store %arg3[%c0_7, %c0_8], %14 {strides = array<i32>} : memref<16x32xf32, #tpu.memory_space<vmem>>, vector<16x32xf32>,
    return
  }
  func.func @transform_0(%arg0: i32) -> (i32, i32) {
    %c0_i32 = arith.constant 0 : i32
    %c0_i32_0 = arith.constant 0 : i32
    return %arg0, %c0_i32 : i32, i32
  }
  func.func @transform_1(%arg0: i32) -> (i32, i32) {
    %c0_i32 = arith.constant 0 : i32
    %c0_i32_0 = arith.constant 0 : i32
    %c0_i32_1 = arith.constant 0 : i32
    return %c0_i32, %c0_i32_0 : i32, i32
  }
  func.func @transform_2(%arg0: i32) -> (i32, i32) {
    %c0_i32 = arith.constant 0 : i32
    %c0_i32_0 = arith.constant 0 : i32
    return %arg0, %c0_i32 : i32, i32
  }
}

</mosaic_0001>

<llo_original>
// kernel: tpu_custom_call.1
$region0: #{tpu_custom_call.1}
  #allocation0 [shape = 'u32[]', space=smem, size = 0x4, offset = 0x4, fixed_abs, tag = 'smem constant byte address 0x4 - core index']
  #allocation1 [shape = 'u32[144,128]{1,0:T(1,128)}', space=vmem, size = 0x12000, scoped, tag = 'internal scratch']
  %s0 = inlined_call_operand.hbm [shape: f32[16,32], index: 0, kind: input, shape index: {}]
  %s1 = inlined_call_operand.vmem [shape: f32[1,32], index: 1, kind: input, shape index: {}]
  %s2 = inlined_call_operand.hbm [shape: f32[16,32], index: 2, kind: output, shape index: {}]
  %s3 = sld [smem:[#allocation0]]
  $region22: #{tpu_custom_call.1} parent=0
    _
  %s5 = ssub.s32 1, %s3
  %s6 = scalar_select 0, %s5, %s3
  $region1: #{tpu_custom_call.1} parent=0
    #allocation2 [shape = 'u8[8192]{0}', space=vmem, size = 0x2000, scoped, tag = 'input window, operand 0, single buffered']
    #allocation3 [shape = 's32[1]{0}', space=sflag, size = 0x4, scoped, tag = 'scoped memory for tpu_custom_call.1']
    #allocation4 [shape = 's32[1]{0}', space=sflag, size = 0x4, scoped, tag = 'scoped memory for tpu_custom_call.1']
    #allocation5 [shape = 'u8[8192]{0}', space=vmem, size = 0x2000, scoped, tag = 'output window, operand 0, single buffered']
    %7 = vsyncpa [#allocation3], 0
    %8 = vsyncpa [#allocation4], 0
    // Predicated region
    $region2: #{tpu_custom_call.1} parent=1 // pred_check
      _
    $region3: #{tpu_custom_call.1} parent=1 // pred_check_branch
      %10 = sbr.rel (0) target = $region5
    $region4: #{tpu_custom_call.1} parent=1 // pred_region
      %s12 = ssub.s32 256, 256
      %13 = vsyncadd [#allocation3], %s12
      %s14 = sshll.u32 [#allocation2], 4
      %s15 = int_to_ptr.vmem [resolvable:$true] %s14
      %20 = dma.hbm_to_vmem [thread:$0]  %s0, 256, %s15, [#allocation3], 128, 128, 8
    $region5: #{tpu_custom_call.1} parent=1 // pred_fallthru
      _
    // Predicated region
    $region6: #{tpu_custom_call.1} parent=1 // pred_check
      _
    $region7: #{tpu_custom_call.1} parent=1 // pred_check_branch
      %22 = sbr.rel (0) target = $region9
    $region8: #{tpu_custom_call.1} parent=1 // pred_region
      _
    $region9: #{tpu_custom_call.1} parent=1 // pred_fallthru
      _
    // Predicated region
    $region10: #{tpu_custom_call.1} parent=1 // pred_check
      _
    $region11: #{tpu_custom_call.1} parent=1 // pred_check_branch
      %24 = sbr.rel (0) target = $region13
    $region12: #{tpu_custom_call.1} parent=1 // pred_region
      %25 = dma.done [#allocation3], 256
    $region13: #{tpu_custom_call.1} parent=1 // pred_fallthru
      _
    %v26 = vld [vmem:[#allocation2] sm:$0xff]
    %v27 = vld [vmem:[#allocation2 + $0x8] sm:$0xff]
    %v28 = vmul.f32 %v26, %v26
    %v29 = vmul.f32 %v27, %v27
    %vm30 = vcmask 261120
    %v31 = vsel %vm30, %v28, 0.0
    %32 = vadd.xlane.f32.xlu0 %v31
    %v33 = vpop.xlane.xlu0 %32
    %v34 = vsel %vm30, %v29, 0.0
    %35 = vadd.xlane.f32.xlu0 %v34
    %v36 = vpop.xlane.xlu0 %35
    %v37 = vrcp.pop 32.0
    %v38 = vmul.f32 %v33, %v37
    %v39 = vmul.f32 %v36, %v37
    %v40 = vadd.f32 %v38, 1e-06
    %v41 = vadd.f32 %v39, 1e-06
    %v42 = vrsqrt.pop %v40
    %v43 = vrsqrt.pop %v41
    %v44 = vmul.f32 %v26, %v42
    %v45 = vmul.f32 %v27, %v43
    %v46 = vld [vmem:[%s1] sm:$0x1]
    %v48 = vlaneseq
    %v49 = vshrl.u32 %v48, 7
    %v50 = vsub.s32 0, %v49
    %v51 = vrot.slane %v46, %v50
    %v53 = vmul.f32 %v51, %v44
    %v54 = vmul.f32 %v51, %v45
    %55 = vst.msk [vmem:[#allocation5] sm:$0xff] %vm30, %v53
    %56 = vst.msk [vmem:[#allocation5 + $0x8] sm:$0xff] %vm30, %v54
    // Predicated region
    $region14: #{tpu_custom_call.1} parent=1 // pred_check
      _
    $region15: #{tpu_custom_call.1} parent=1 // pred_check_branch
      %58 = sbr.rel (0) target = $region17
    $region16: #{tpu_custom_call.1} parent=1 // pred_region
      %s60 = ssub.s32 256, 256
      %61 = vsyncadd [#allocation4], %s60
      %s62 = sshll.u32 [#allocation5], 4
      %s63 = int_to_ptr.vmem [resolvable:$true] %s62
      %68 = dma.vmem_to_hbm [thread:$0]  %s63, 256, %s2, [#allocation4], 128, 128, 8
    $region17: #{tpu_custom_call.1} parent=1 // pred_fallthru
      _
    // Predicated region
    $region18: #{tpu_custom_call.1} parent=1 // pred_check
      _
    $region19: #{tpu_custom_call.1} parent=1 // pred_check_branch
      %70 = sbr.rel (0) target = $region21
    $region20: #{tpu_custom_call.1} parent=1 // pred_region
      %71 = dma.done [#allocation4], 256
    $region21: #{tpu_custom_call.1} parent=1 // pred_fallthru
      _
    %72 = vsyncpa [#allocation3], 1
    %73 = vsyncpa [#allocation4], 1

</llo_original>
